<compile_context>
chip_gen: v7x
topology: tpu7x:2x2x1
jax: 0.10.0
libtpu: 0.0.40
codegen_flags: <defaults>
</compile_context>

<pallas_src>
import jax
import jax.numpy as jnp
import numpy as np
from jax import lax
from jax.experimental import pallas as pl
from jax.experimental.pallas import tpu as pltpu


_LANES = 128  # TPU lane width: pad contraction / output-channel dims to this


def _round_up(x, m):
    return (x + m - 1) // m * m


def _pick_tile_m(m_rows):
    """Largest 128-multiple tile (<=512) keeping >=2 grid steps when possible."""
    m128 = _round_up(max(m_rows, 1), _LANES)
    for t in (512, 256, 128):
        if m128 > t:          # t is a 128-multiple, so m_rows > t  =>  >= 2 steps
            return t
    return 128


def _gemm_bias_silu_kernel(a_ref, w_ref, bias_ref, o_ref):
    """Fused (patches @ bn-folded-weight) -> +bias -> SiLU for one output tile.

    a_ref:    (TILE_M, KC_pad)  bf16 im2col patch rows (lane-dense)
    w_ref:    (KC_pad, TILE_N)  bf16 conv weight with BN scale folded in
    bias_ref: (1, TILE_N)       f32 folded BN bias (beta - mean * scale)
    o_ref:    (TILE_M, TILE_N)  output tile (lane-dense, unmasked stores)
    """
    # Single deep contraction on the MXU, f32 accumulation.
    acc = jnp.dot(a_ref[...], w_ref[...], preferred_element_type=jnp.float32)
    y = acc + bias_ref[...]
    # SiLU: sigmoid via exp + approximate reciprocal (both on the EUP slot).
    s = pl.reciprocal(1.0 + jnp.exp(-y), approx=True)
    o_ref[...] = (y * s).astype(o_ref.dtype)


def conv_bn_silu(x, w, gamma, beta, running_mean, running_var, *,
                 stride=1, padding=None, eps=1e-5,
                 compute_dtype=jnp.bfloat16, out_dtype=None):
    """x: (N, C1, H, W) NCHW; w: (C2, C1, K, K) OIHW. Returns NCHW output."""
    N, C1, H, W = x.shape
    C2, _, K, _ = w.shape
    S = stride
    p = (K // 2) if padding is None else padding
    H_out = (H + 2 * p - K) // S + 1
    W_out = (W + 2 * p - K) // S + 1
    out_dtype = x.dtype if out_dtype is None else out_dtype

    # ---------------- wrapper-side layout work (one-time) ----------------
    # Cast to the compute dtype BEFORE building the K*K taps: the im2col patch
    # matrix is ~K*K x the activation size, so it is materialized in bf16.
    x_nhwc = jnp.transpose(x, (0, 2, 3, 1)).astype(compute_dtype)
    x_p = jnp.pad(x_nhwc, ((0, 0), (p, p), (p, p), (0, 0)))

    # im2col: K*K shifted / strided views concatenated over the channel axis.
    taps = []
    for kh in range(K):
        for kw in range(K):
            taps.append(x_p[:,
                            kh:kh + (H_out - 1) * S + 1:S,
                            kw:kw + (W_out - 1) * S + 1:S,
                            :])
    patches = jnp.concatenate(taps, axis=-1)        # (N, H_out, W_out, K*K*C1)

    KC = K * K * C1
    M = N * H_out * W_out
    KC_pad = _round_up(KC, _LANES)
    C2_pad = _round_up(C2, _LANES)
    TILE_M = _pick_tile_m(M)
    TILE_N = 256 if (C2_pad % 256 == 0) else 128
    M_pad = _round_up(M, TILE_M)

    patches = patches.reshape(M, KC)
    patches = jnp.pad(patches, ((0, M_pad - M), (0, KC_pad - KC)))

    # Fold BatchNorm (eval mode) into the weight columns and a per-channel
    # bias.  The fold happens in f32 BEFORE casting the weight to bf16.
    scale = (gamma / jnp.sqrt(running_var + eps)).astype(jnp.float32)
    bias = (beta - running_mean * scale).astype(jnp.float32)

    # OIHW -> HWIO -> (K*K*C1, C2); fold scale; zero-pad to lane-dense tiles.
    w_flat = jnp.transpose(w, (2, 3, 1, 0)).reshape(KC, C2).astype(jnp.float32)
    w_flat = w_flat * scale[None, :]
    w_flat = jnp.pad(w_flat, ((0, KC_pad - KC), (0, C2_pad - C2)))
    w_flat = w_flat.astype(compute_dtype)

    bias2 = jnp.pad(bias, (0, C2_pad - C2)).reshape(1, C2_pad)

    grid = (M_pad // TILE_M, C2_pad // TILE_N)

    out_pad = pl.pallas_call(
        _gemm_bias_silu_kernel,
        out_shape=jax.ShapeDtypeStruct((M_pad, C2_pad), out_dtype),
        grid=grid,
        in_specs=[
            pl.BlockSpec((TILE_M, KC_pad), lambda i, j: (i, 0)),
            pl.BlockSpec((KC_pad, TILE_N), lambda i, j: (0, j)),
            pl.BlockSpec((1, TILE_N), lambda i, j: (0, j)),
        ],
        out_specs=pl.BlockSpec((TILE_M, TILE_N), lambda i, j: (i, j)),
        compiler_params=pltpu.CompilerParams(
            dimension_semantics=("parallel", "parallel"),
            vmem_limit_bytes=48 * 1024 * 1024),
    )(patches, w_flat, bias2)

    out = out_pad[:M, :C2].reshape(N, H_out, W_out, C2)
    return jnp.transpose(out, (0, 3, 1, 2))          # back to NCHW


def _reference(x, w, gamma, beta, running_mean, running_var, *,
               stride=1, padding=None, eps=1e-5):
    K = w.shape[-1]
    p = (K // 2) if padding is None else padding
    y = lax.conv_general_dilated(
        x, w, window_strides=(stride, stride),
        padding=[(p, p), (p, p)],
        dimension_numbers=("NCHW", "OIHW", "NCHW"))
    scale = gamma / jnp.sqrt(running_var + eps)
    bias = beta - running_mean * scale
    y = y * scale[None, :, None, None] + bias[None, :, None, None]
    return y * jax.nn.sigmoid(y)


if __name__ == "__main__":
    # Conv(c1=8, c2=16, k=3, s=1)  ->  p = k // 2 = 1
    N, C1, C2, H, W, K = 2, 8, 16, 16, 16, 3

    key = jax.random.PRNGKey(0)
    kx, kw, kg, kb, km, kv = jax.random.split(key, 6)

    x = jax.random.normal(kx, (N, C1, H, W), dtype=jnp.float32)
    fan_in = C1 * K * K
    bound = 1.0 / np.sqrt(fan_in)
    w = jax.random.uniform(kw, (C2, C1, K, K), dtype=jnp.float32,
                           minval=-bound, maxval=bound)
    gamma = jax.random.uniform(kg, (C2,), dtype=jnp.float32, minval=0.5, maxval=1.5)
    beta = jax.random.normal(kb, (C2,), dtype=jnp.float32) * 0.1
    running_mean = jax.random.normal(km, (C2,), dtype=jnp.float32) * 0.1
    running_var = jax.random.uniform(kv, (C2,), dtype=jnp.float32,
                                     minval=0.5, maxval=1.5)

    # bf16 MXU inputs (f32 accumulation) + approx-reciprocal sigmoid introduce
    # ~1e-2 relative error vs the f32 reference; tolerance is set accordingly.
    for S in (1, 2):
        out = conv_bn_silu(x, w, gamma, beta, running_mean, running_var,
                           stride=S, padding=None)
        out = jax.block_until_ready(out)
        ref = _reference(x, w, gamma, beta, running_mean, running_var,
                         stride=S, padding=None)
        ref = jax.block_until_ready(ref)
        np.testing.assert_allclose(np.asarray(out), np.asarray(ref),
                                   rtol=2e-2, atol=2e-2)

    print("KERNEL_OK")
</pallas_src>

<mosaic_0001>
module attributes {stable_mosaic.version = 11 : i64} {
  func.func @_gemm_bias_silu_kernel(%arg0: i32, %arg1: i32, %arg2: memref<256x128xbf16, #tpu.memory_space<vmem>>, %arg3: memref<128x128xbf16, #tpu.memory_space<vmem>>, %arg4: memref<1x128xf32, #tpu.memory_space<vmem>>, %arg5: memref<256x128xf32, #tpu.memory_space<vmem>>) attributes {dimension_semantics = [#tpu.dimension_semantics<parallel>, #tpu.dimension_semantics<parallel>], iteration_bounds = array<i64: 2, 1>, scalar_prefetch = 0 : i64, scratch_operands = 0 : i64, tpu.core_type = #tpu.core_type<tc>, window_params = [{transform_indices = @transform_0, window_bounds = array<i64: 256, 128>}, {transform_indices = @transform_1, window_bounds = array<i64: 128, 128>}, {transform_indices = @transform_2, window_bounds = array<i64: 1, 128>}, {transform_indices = @transform_3, window_bounds = array<i64: 256, 128>}]} {
    %c0 = arith.constant 0 : index
    %c0_0 = arith.constant 0 : index
    %0 = vector.load %arg2[%c0, %c0_0] : memref<256x128xbf16, #tpu.memory_space<vmem>>, vector<256x128xbf16>
    %c0_1 = arith.constant 0 : index
    %c0_2 = arith.constant 0 : index
    %1 = vector.load %arg3[%c0_1, %c0_2] : memref<128x128xbf16, #tpu.memory_space<vmem>>, vector<128x128xbf16>
    %cst = arith.constant dense<0.000000e+00> : vector<256x128xf32>
    %2 = tpu.matmul %0, %1, %cst {dimension_numbers = #tpu.dot_dimension_numbers<[1], [0], [0], [1], [0, 0, 1, 1], [], []>} : vector<256x128xbf16>, vector<128x128xbf16>, vector<256x128xf32> -> vector<256x128xf32>
    %c0_3 = arith.constant 0 : index
    %c0_4 = arith.constant 0 : index
    %3 = vector.load %arg4[%c0_3, %c0_4] : memref<1x128xf32, #tpu.memory_space<vmem>>, vector<1x128xf32>
    %4 = vector.broadcast %3 : vector<1x128xf32> to vector<256x128xf32>
    %5 = arith.addf %2, %4 : vector<256x128xf32>
    %cst_5 = arith.constant 0.000000e+00 : f32
    %6 = vector.broadcast %cst_5 : f32 to vector<256x128xf32>
    %7 = arith.subf %6, %5 : vector<256x128xf32>
    %8 = math.exp %7 : vector<256x128xf32>
    %cst_6 = arith.constant 1.000000e+00 : f32
    %9 = vector.broadcast %cst_6 : f32 to vector<256x128xf32>
    %10 = arith.addf %9, %8 : vector<256x128xf32>
    %11 = tpu.reciprocal %10 {approx = true} : vector<256x128xf32> -> vector<256x128xf32>
    %12 = arith.mulf %5, %11 : vector<256x128xf32>
    %c0_7 = arith.constant 0 : index
    %c0_8 = arith.constant 0 : index
    %13 = vector.load %arg5[%c0_7, %c0_8] : memref<256x128xf32, #tpu.memory_space<vmem>>, vector<256x128xf32>
    tpu.vector_store %arg5[%c0_7, %c0_8], %12 {strides = array<i32>} : memref<256x128xf32, #tpu.memory_space<vmem>>, vector<256x128xf32>,
    return
  }
  func.func @transform_0(%arg0: i32, %arg1: i32) -> (i32, i32) {
    %c0_i32 = arith.constant 0 : i32
    %c0_i32_0 = arith.constant 0 : i32
    return %arg0, %c0_i32 : i32, i32
  }
  func.func @transform_1(%arg0: i32, %arg1: i32) -> (i32, i32) {
    %c0_i32 = arith.constant 0 : i32
    %c0_i32_0 = arith.constant 0 : i32
    return %c0_i32, %arg1 : i32, i32
  }
  func.func @transform_2(%arg0: i32, %arg1: i32) -> (i32, i32) {
    %c0_i32 = arith.constant 0 : i32
    %c0_i32_0 = arith.constant 0 : i32
    return %c0_i32, %arg1 : i32, i32
  }
  func.func @transform_3(%arg0: i32, %arg1: i32) -> (i32, i32) {
    %c0_i32 = arith.constant 0 : i32
    return %arg0, %arg1 : i32, i32
  }
}

</mosaic_0001>

<llo_original>
// kernel: tpu_custom_call.1
$region0: #{tpu_custom_call.1}
  #allocation0 [shape = 'u32[]', space=smem, size = 0x4, offset = 0x4, fixed_abs, tag = 'smem constant byte address 0x4 - core index']
  #allocation1 [shape = 'u32[144,128]{1,0:T(1,128)}', space=vmem, size = 0x12000, scoped, tag = 'internal scratch']
  %s0 = inlined_call_operand.hbm [shape: bf16[512,128], index: 0, kind: input, shape index: {}]
  %s1 = inlined_call_operand.hbm [shape: bf16[128,128], index: 1, kind: input, shape index: {}]
  %s2 = inlined_call_operand.vmem [shape: f32[1,128], index: 2, kind: input, shape index: {}]
  %s3 = inlined_call_operand.hbm [shape: f32[512,128], index: 3, kind: output, shape index: {}]
  %s4 = sld [smem:[#allocation0]]
  $region53: #{tpu_custom_call.1} parent=0
    _
  %s6 = ssub.s32 1, %s4
  %s7 = scalar_select 0, %s6, %s4
  $region1: #{tpu_custom_call.1} parent=0
    #allocation2 [shape = 'u8[131072]{0}', space=vmem, size = 0x20000, scoped, tag = 'input window, operand 0']
    #allocation3 [shape = 's32[2]{0}', space=sflag, size = 0x8, scoped, tag = 'scoped memory for tpu_custom_call.1']
    #allocation4 [shape = 's32[2]{0}', space=sflag, size = 0x8, scoped, tag = 'scoped memory for tpu_custom_call.1']
    #allocation5 [shape = 'u8[32768]{0}', space=vmem, size = 0x8000, scoped, tag = 'input window, operand 1, single buffered']
    #allocation6 [shape = 's32[1]{0}', space=sflag, size = 0x4, scoped, tag = 'scoped memory for tpu_custom_call.1']
    #allocation7 [shape = 'u8[262144]{0}', space=vmem, size = 0x40000, scoped, tag = 'output window, operand 0']
    %8 = vsyncpa [#allocation3], 0
    %s9 = scalar_lea.sflag [#allocation3], 1
    %10 = vsyncpa %s9, 0
    %11 = vsyncpa [#allocation6], 0
    %12 = vsyncpa [#allocation4], 0
    %s13 = scalar_lea.sflag [#allocation4], 1
    %14 = vsyncpa %s13, 0
    loop: start=0, step=1, limit=4
    $region2: #{tpu_custom_call.1} parent=1 // loop_pre_header
      _
    $region3: #{tpu_custom_call.1} parent=1 // loop_header
      %s16 = sphi 0, %s20
      %p17 = scmp.ge.s32.totalorder %s16, 4
      %s23 = sphi 0, %s35
      %s24 = sphi 0, %s31
      %s25 = sphi 0, %s23
      %s26 = sphi 0, %s24
      %s27 = sphi 0, %s25
      %s28 = sphi 0, %s26
      %s38 = sphi 0, %s40
      %s41 = sphi 0, %s38
      %s42 = sphi 0, %s41
      %s58 = sphi 0, %s42
      %s64 = sphi 0, %s66
      %s67 = sphi 0, %s64
      %s68 = sphi 0, %s67
      %s84 = sphi 0, %s68
      %s90 = sphi 0, %s92
      %s93 = sphi 0, %s90
      %s94 = sphi 0, %s93
      %s110 = sphi 0, %s94
      %s118 = sphi 0, %s120
      %s121 = sphi 0, %s118
      %s122 = sphi 0, %s121
      %s138 = sphi 0, %s122
    $region4: #{tpu_custom_call.1} parent=1 // loop_header_branch
      %19 = sbr.rel (%p17) target = $region8
    $region5: #{tpu_custom_call.1} parent=1 // loop_body
      %s21 = ssub.s32 %s16, 1
      %s22 = ssub.s32 %s16, 2
      %s29 = sadd.s32 1, %s24
      %p30 = scmp.ge.s32.totalorder %s29, 1
      %s31 = scalar_select %p30, 0, %s29
      %s32 = sadd.s32 1, %s23
      %s33 = scalar_select %p30, %s32, %s23
      %p34 = scmp.ge.s32.totalorder %s33, 2
      %s35 = scalar_select %p34, 0, %s33
      %s36 = ssub.s32 %s23, %s35
      %p37 = scmp.eq.s32.totalorder %s36, 0
      %s39 = sadd.s32 %s38, 1
      %s40 = scalar_select %p37, %s38, %s39
      %p43 = pneg %p37
      %p44 = scmp.eq.s32.totalorder %s16, 1
      %p45 = por %p43, %p44
      %p46 = scmp.ne.s32.totalorder %s38, %s41
      %p47 = scmp.eq.s32.totalorder %s16, 0
      %p48 = por %p46, %p47
      %p49 = scmp.ne.s32.totalorder %s38, %s41
      %p50 = scmp.eq.s32.totalorder %s21, 1
      %p51 = por %p49, %p50
      %p52 = scmp.ne.s32.totalorder %s41, %s42
      %p53 = scmp.eq.s32.totalorder %s21, 0
      %p54 = por %p52, %p53
      %p55 = scmp.ne.s32.totalorder %s41, %s42
      %p56 = scmp.eq.s32.totalorder %s22, 1
      %p57 = por %p55, %p56
      %p59 = scmp.ne.s32.totalorder %s42, %s58
      %p60 = scmp.eq.s32.totalorder %s22, 0
      %p61 = por %p59, %p60
      %s62 = ssub.s32 %s24, %s31
      %p63 = scmp.eq.s32.totalorder %s62, 0
      %s65 = sadd.s32 %s64, 1
      %s66 = scalar_select %p63, %s64, %s65
      %p69 = pneg %p63
      %p70 = scmp.eq.s32.totalorder %s16, 1
      %p71 = por %p69, %p70
      %p72 = scmp.ne.s32.totalorder %s64, %s67
      %p73 = scmp.eq.s32.totalorder %s16, 0
      %p74 = por %p72, %p73
      %p75 = scmp.ne.s32.totalorder %s64, %s67
      %p76 = scmp.eq.s32.totalorder %s21, 1
      %p77 = por %p75, %p76
      %p78 = scmp.ne.s32.totalorder %s67, %s68
      %p79 = scmp.eq.s32.totalorder %s21, 0
      %p80 = por %p78, %p79
      %p81 = scmp.ne.s32.totalorder %s67, %s68
      %p82 = scmp.eq.s32.totalorder %s22, 1
      %p83 = por %p81, %p82
      %p85 = scmp.ne.s32.totalorder %s68, %s84
      %p86 = scmp.eq.s32.totalorder %s22, 0
      %p87 = por %p85, %p86
      %s88 = ssub.s32 %s24, %s31
      %p89 = scmp.eq.s32.totalorder %s88, 0
      %s91 = sadd.s32 %s90, 1
      %s92 = scalar_select %p89, %s90, %s91
      %p95 = pneg %p89
      %p96 = scmp.eq.s32.totalorder %s16, 1
      %p97 = por %p95, %p96
      %p98 = scmp.ne.s32.totalorder %s90, %s93
      %p99 = scmp.eq.s32.totalorder %s16, 0
      %p100 = por %p98, %p99
      %p101 = scmp.ne.s32.totalorder %s90, %s93
      %p102 = scmp.eq.s32.totalorder %s21, 1
      %p103 = por %p101, %p102
      %p104 = scmp.ne.s32.totalorder %s93, %s94
      %p105 = scmp.eq.s32.totalorder %s21, 0
      %p106 = por %p104, %p105
      %p107 = scmp.ne.s32.totalorder %s93, %s94
      %p108 = scmp.eq.s32.totalorder %s22, 1
      %p109 = por %p107, %p108
      %p111 = scmp.ne.s32.totalorder %s94, %s110
      %p112 = scmp.eq.s32.totalorder %s22, 0
      %p113 = por %p111, %p112
      %s114 = ssub.s32 %s23, %s35
      %s115 = ssub.s32 %s24, %s31
      %s116 = sor.u32 %s114, %s115
      %p117 = scmp.eq.s32.totalorder %s116, 0
      %s119 = sadd.s32 %s118, 1
      %s120 = scalar_select %p117, %s118, %s119
      %p123 = pneg %p117
      %p124 = scmp.eq.s32.totalorder %s16, 1
      %p125 = por %p123, %p124
      %p126 = scmp.ne.s32.totalorder %s118, %s121
      %p127 = scmp.eq.s32.totalorder %s16, 0
      %p128 = por %p126, %p127
      %p129 = scmp.ne.s32.totalorder %s118, %s121
      %p130 = scmp.eq.s32.totalorder %s21, 1
      %p131 = por %p129, %p130
      %p132 = scmp.ne.s32.totalorder %s121, %s122
      %p133 = scmp.eq.s32.totalorder %s21, 0
      %p134 = por %p132, %p133
      %p135 = scmp.ne.s32.totalorder %s121, %s122
      %p136 = scmp.eq.s32.totalorder %s22, 1
      %p137 = por %p135, %p136
      %p139 = scmp.ne.s32.totalorder %s122, %s138
      %p140 = scmp.eq.s32.totalorder %s22, 0
      %p141 = por %p139, %p140
      %p142 = scmp.le.s32.totalorder 1, %s16
      %p143 = scmp.lt.s32.totalorder %s16, 3
      %p144 = pnand %p142, %p143
      %p145 = pneg %p144
      // Predicated region
      $region9: #{tpu_custom_call.1} parent=5 // pred_check
        _
      $region10: #{tpu_custom_call.1} parent=5 // pred_check_branch
        %147 = sbr.rel (%p144) target = $region12
      $region11: #{tpu_custom_call.1} parent=5 // pred_region
        %s148 = ssub.s32 %s16, 1
        // Predicated region
        $region13: #{tpu_custom_call.1} parent=11 // pred_check
          %p149 = pneg %p80
        $region14: #{tpu_custom_call.1} parent=11 // pred_check_branch
          %151 = sbr.rel (%p149) target = $region16
        $region15: #{tpu_custom_call.1} parent=11 // pred_region
          %s153 = ssub.s32 1024, 1024
          %154 = vsyncadd [#allocation6], %s153
          %s155 = smul.addr %s26, 64
          %s156 = scalar_lea.hbm %s1, %s155
          %s157 = sshll.u32 [#allocation5], 4
          %s158 = int_to_ptr.vmem [resolvable:$true] %s157
          %163 = dma.hbm_to_vmem [thread:$0]  %s156, 1024, %s158, [#allocation6], 64, 64, 4
        $region16: #{tpu_custom_call.1} parent=11 // pred_fallthru
          _
        // Predicated region
        $region17: #{tpu_custom_call.1} parent=11 // pred_check
          %p164 = pneg %p106
        $region18: #{tpu_custom_call.1} parent=11 // pred_check_branch
          %166 = sbr.rel (%p164) target = $region20
        $region19: #{tpu_custom_call.1} parent=11 // pred_region
          %p167 = scmp.lt.s32.totalorder %s26, 0
          %s168 = scalar_select %p167, %s26, 0
          %s169 = scalar_lea.vmem %s2, %s168
        $region20: #{tpu_custom_call.1} parent=11 // pred_fallthru
          _
      $region12: #{tpu_custom_call.1} parent=5 // pred_fallthru
        _
      %p170 = scmp.lt.s32.totalorder %s16, 2
      // Predicated region
      $region21: #{tpu_custom_call.1} parent=5 // pred_check
        %p171 = pneg %p170
      $region22: #{tpu_custom_call.1} parent=5 // pred_check_branch
        %173 = sbr.rel (%p171) target = $region24
      $region23: #{tpu_custom_call.1} parent=5 // pred_region
        // Predicated region
        $region25: #{tpu_custom_call.1} parent=23 // pred_check
          %p174 = pneg %p48
        $region26: #{tpu_custom_call.1} parent=23 // pred_check_branch
          %176 = sbr.rel (%p174) target = $region28
        $region27: #{tpu_custom_call.1} parent=23 // pred_region
          %s177 = sand.u32 %s38, 1
          %s178 = scalar_lea.sflag [#allocation3], %s177
          %s179 = sand.u32 %s38, 1
          %s180 = smul.addr %s179, 128
          %s181 = scalar_lea.vmem [#allocation2], %s180
          %s182 = smul.u32 32, %s23
          %s184 = ssub.s32 2048, 2048
          %185 = vsyncadd %s178, %s184
          %s186 = smul.addr %s182, 64
          %s187 = scalar_lea.hbm %s0, %s186
          %s188 = sshll.u32 %s181, 4
          %s189 = int_to_ptr.vmem [resolvable:$true] %s188
          %194 = dma.hbm_to_vmem [thread:$0]  %s187, 2048, %s189, %s178, 64, 64, 4
        $region28: #{tpu_custom_call.1} parent=23 // pred_fallthru
          _
      $region24: #{tpu_custom_call.1} parent=5 // pred_fallthru
        _
      %p195 = scmp.le.s32.totalorder 1, %s16
      %p196 = scmp.lt.s32.totalorder %s16, 3
      %p197 = pnand %p195, %p196
      %p198 = pneg %p197
      // Predicated region
      $region29: #{tpu_custom_call.1} parent=5 // pred_check
        _
      $region30: #{tpu_custom_call.1} parent=5 // pred_check_branch
        %200 = sbr.rel (%p197) target = $region32
      $region31: #{tpu_custom_call.1} parent=5 // pred_region
        %s201 = ssub.s32 %s16, 1
        %s202 = sand.u32 %s41, 1
        %s203 = scalar_lea.sflag [#allocation3], %s202
        %s204 = sand.u32 %s41, 1
        %s205 = smul.addr %s204, 128
        %s206 = scalar_lea.vmem [#allocation2], %s205
        // Predicated region
        $region33: #{tpu_custom_call.1} parent=31 // pred_check
          %p207 = pneg %p54
        $region34: #{tpu_custom_call.1} parent=31 // pred_check_branch
          %209 = sbr.rel (%p207) target = $region36
        $region35: #{tpu_custom_call.1} parent=31 // pred_region
          %210 = dma.done %s203, 2048
        $region36: #{tpu_custom_call.1} parent=31 // pred_fallthru
          _
        // Predicated region
        $region37: #{tpu_custom_call.1} parent=31 // pred_check
          %p211 = pneg %p80
        $region38: #{tpu_custom_call.1} parent=31 // pred_check_branch
          %213 = sbr.rel (%p211) target = $region40
        $region39: #{tpu_custom_call.1} parent=31 // pred_region
          %214 = dma.done [#allocation6], 1024
        $region40: #{tpu_custom_call.1} parent=31 // pred_fallthru
          _
        %s215 = sand.u32 %s41, 1
        %s216 = scalar_lea.sflag [#allocation3], %s215
        %s217 = sand.u32 %s41, 1
        %s218 = smul.addr %s217, 128
        %s219 = scalar_lea.vmem [#allocation2], %s218
        %p220 = pneg %p54
        %p221 = pneg %p51
        %p222 = pneg %p80
        %p223 = pneg %p77
        %p224 = scmp.lt.s32.totalorder %s26, 0
        %s225 = scalar_select %p224, %s26, 0
        %s226 = scalar_lea.vmem %s2, %s225
        %p227 = pneg %p106
        %p228 = pneg %p103
        %p229 = pneg %p134
        %p230 = pneg %p131
        %s231 = sand.u32 %s121, 1
        %s232 = scalar_lea.sflag [#allocation4], %s231
        %s233 = sand.u32 %s121, 1
        %s234 = smul.addr %s233, 256
        %s235 = scalar_lea.vmem [#allocation7], %s234
        %s236 = smul.u32 32, %s25
        %p237 = scmp.lt.s32.totalorder %s26, 0
        %s238 = scalar_select %p237, %s26, 0
        %s239 = scalar_lea.vmem %s2, %s238
        %s240 = smul.u32 32, %s25
        %v242 = vld [vmem:[%s206] sm:$0xf]
        %v243 = vld [vmem:[%s206 + $0x4] sm:$0xf]
        %v244 = vld [vmem:[%s206 + $0x8] sm:$0xf]
        %v245 = vld [vmem:[%s206 + $0xc] sm:$0xf]
        %v246 = vld [vmem:[%s206 + $0x10] sm:$0xf]
        %v247 = vld [vmem:[%s206 + $0x14] sm:$0xf]
        %v248 = vld [vmem:[%s206 + $0x18] sm:$0xf]
        %v249 = vld [vmem:[%s206 + $0x1c] sm:$0xf]
        %v250 = vld [vmem:[%s206 + $0x20] sm:$0xf]
        %v251 = vld [vmem:[%s206 + $0x24] sm:$0xf]
        %v252 = vld [vmem:[%s206 + $0x28] sm:$0xf]
        %v253 = vld [vmem:[%s206 + $0x2c] sm:$0xf]
        %v254 = vld [vmem:[%s206 + $0x30] sm:$0xf]
        %v255 = vld [vmem:[%s206 + $0x34] sm:$0xf]
        %v256 = vld [vmem:[%s206 + $0x38] sm:$0xf]
        %v257 = vld [vmem:[%s206 + $0x3c] sm:$0xf]
        %v258 = vld [vmem:[%s206 + $0x40] sm:$0xf]
        %v259 = vld [vmem:[%s206 + $0x44] sm:$0xf]
        %v260 = vld [vmem:[%s206 + $0x48] sm:$0xf]
        %v261 = vld [vmem:[%s206 + $0x4c] sm:$0xf]
        %v262 = vld [vmem:[%s206 + $0x50] sm:$0xf]
        %v263 = vld [vmem:[%s206 + $0x54] sm:$0xf]
        %v264 = vld [vmem:[%s206 + $0x58] sm:$0xf]
        %v265 = vld [vmem:[%s206 + $0x5c] sm:$0xf]
        %v266 = vld [vmem:[%s206 + $0x60] sm:$0xf]
        %v267 = vld [vmem:[%s206 + $0x64] sm:$0xf]
        %v268 = vld [vmem:[%s206 + $0x68] sm:$0xf]
        %v269 = vld [vmem:[%s206 + $0x6c] sm:$0xf]
        %v270 = vld [vmem:[%s206 + $0x70] sm:$0xf]
        %v271 = vld [vmem:[%s206 + $0x74] sm:$0xf]
        %v272 = vld [vmem:[%s206 + $0x78] sm:$0xf]
        %v273 = vld [vmem:[%s206 + $0x7c] sm:$0xf]
        %v274 = vld [vmem:[#allocation5] sm:$0xf]
        %v275 = vld [vmem:[#allocation5 + $0x4] sm:$0xf]
        %v276 = vld [vmem:[#allocation5 + $0x8] sm:$0xf]
        %v277 = vld [vmem:[#allocation5 + $0xc] sm:$0xf]
        %v278 = vld [vmem:[#allocation5 + $0x10] sm:$0xf]
        %v279 = vld [vmem:[#allocation5 + $0x14] sm:$0xf]
        %v280 = vld [vmem:[#allocation5 + $0x18] sm:$0xf]
        %v281 = vld [vmem:[#allocation5 + $0x1c] sm:$0xf]
        %v282 = vld [vmem:[#allocation5 + $0x20] sm:$0xf]
        %v283 = vld [vmem:[#allocation5 + $0x24] sm:$0xf]
        %v284 = vld [vmem:[#allocation5 + $0x28] sm:$0xf]
        %v285 = vld [vmem:[#allocation5 + $0x2c] sm:$0xf]
        %v286 = vld [vmem:[#allocation5 + $0x30] sm:$0xf]
        %v287 = vld [vmem:[#allocation5 + $0x34] sm:$0xf]
        %v288 = vld [vmem:[#allocation5 + $0x38] sm:$0xf]
        %v289 = vld [vmem:[#allocation5 + $0x3c] sm:$0xf]
        %v290 = vld [vmem:[%s239] sm:$0x1]
        %v292 = vlaneseq
        %v293 = vshrl.u32 %v292, 7
        %v294 = vsub.s32 0, %v293
        %v295 = vrot.slane %v290, %v294
        %v329 = vunpack.c.l.b16 %v242
        %v330 = vunpack.c.l.b16 %v243
        %v331 = vunpack.c.l.b16 %v244
        %v332 = vunpack.c.l.b16 %v245
        %v333 = vunpack.c.l.b16 %v246
        %v334 = vunpack.c.l.b16 %v247
        %v335 = vunpack.c.l.b16 %v248
        %v336 = vunpack.c.l.b16 %v249
        %v337 = vunpack.c.l.b16 %v250
        %v338 = vunpack.c.l.b16 %v251
        %v339 = vunpack.c.l.b16 %v252
        %v340 = vunpack.c.l.b16 %v253
        %v341 = vunpack.c.l.b16 %v254
        %v342 = vunpack.c.l.b16 %v255
        %v343 = vunpack.c.l.b16 %v256
        %v344 = vunpack.c.l.b16 %v257
        %v345 = vunpack.c.l.b16 %v258
        %v346 = vunpack.c.l.b16 %v259
        %v347 = vunpack.c.l.b16 %v260
        %v348 = vunpack.c.l.b16 %v261
        %v349 = vunpack.c.l.b16 %v262
        %v350 = vunpack.c.l.b16 %v263
        %v351 = vunpack.c.l.b16 %v264
        %v352 = vunpack.c.l.b16 %v265
        %v353 = vunpack.c.l.b16 %v266
        %v354 = vunpack.c.l.b16 %v267
        %v355 = vunpack.c.l.b16 %v268
        %v356 = vunpack.c.l.b16 %v269
        %v357 = vunpack.c.l.b16 %v270
        %v358 = vunpack.c.l.b16 %v271
        %v359 = vunpack.c.l.b16 %v272
        %v360 = vunpack.c.l.b16 %v273
        %v361 = vpack.c.b16 %v330, %v329
        %v362 = vpack.c.b16 %v332, %v331
        %v363 = vpack.c.b16 %v334, %v333
        %v364 = vpack.c.b16 %v336, %v335
        %v365 = vpack.c.b16 %v338, %v337
        %v366 = vpack.c.b16 %v340, %v339
        %v367 = vpack.c.b16 %v342, %v341
        %v368 = vpack.c.b16 %v344, %v343
        %v369 = vpack.c.b16 %v346, %v345
        %v370 = vpack.c.b16 %v348, %v347
        %v371 = vpack.c.b16 %v350, %v349
        %v372 = vpack.c.b16 %v352, %v351
        %v373 = vpack.c.b16 %v354, %v353
        %v374 = vpack.c.b16 %v356, %v355
        %v375 = vpack.c.b16 %v358, %v357
        %v376 = vpack.c.b16 %v360, %v359
        %v409 = vunpack.c.l.b16 %v274
        %v410 = vunpack.c.l.b16 %v275
        %v411 = vunpack.c.l.b16 %v276
        %v412 = vunpack.c.l.b16 %v277
        %v413 = vunpack.c.l.b16 %v278
        %v414 = vunpack.c.l.b16 %v279
        %v415 = vunpack.c.l.b16 %v280
        %v416 = vunpack.c.l.b16 %v281
        %v417 = vunpack.c.l.b16 %v282
        %v418 = vunpack.c.l.b16 %v283
        %v419 = vunpack.c.l.b16 %v284
        %v420 = vunpack.c.l.b16 %v285
        %v421 = vunpack.c.l.b16 %v286
        %v422 = vunpack.c.l.b16 %v287
        %v423 = vunpack.c.l.b16 %v288
        %v424 = vunpack.c.l.b16 %v289
        %v425 = vpack.c.b16 %v410, %v409
        %v426 = vpack.c.b16 %v412, %v411
        %v427 = vpack.c.b16 %v414, %v413
        %v428 = vpack.c.b16 %v416, %v415
        %v429 = vpack.c.b16 %v418, %v417
        %v430 = vpack.c.b16 %v420, %v419
        %v431 = vpack.c.b16 %v422, %v421
        %v432 = vpack.c.b16 %v424, %v423
        %441 = vmatprep.subr.bf16.mxu0 0
        %442 = vmatpush1.bf16.msra.mxu0 %v425
        %443 = vmatprep.subr.bf16.mxu0 0
        %444 = vmatpush1.bf16.msra.mxu0 %v426
        %445 = vmatprep.subr.bf16.mxu0 0
        %446 = vmatpush1.bf16.msra.mxu0 %v427
        %447 = vmatprep.subr.bf16.mxu0 0
        %448 = vmatpush1.bf16.msra.mxu0 %v428
        %449 = vmatprep.subr.bf16.mxu0 0
        %450 = vmatpush1.bf16.msra.mxu0 %v429
        %451 = vmatprep.subr.bf16.mxu0 0
        %452 = vmatpush1.bf16.msra.mxu0 %v430
        %453 = vmatprep.subr.bf16.mxu0 0
        %454 = vmatpush1.bf16.msra.mxu0 %v431
        %455 = vmatprep.subr.bf16.mxu0 0
        %456 = vmatpush1.bf16.msra.mxu0 %v432
        %457 = vmatprep.subr.bf16.mxu0 0
        %458 = vmatpush1.bf16.msra.mxu0 0
        %459 = vmatprep.subr.bf16.mxu0 0
        %460 = vmatpush1.bf16.msra.mxu0 0
        %461 = vmatprep.subr.bf16.mxu0 0
        %462 = vmatpush1.bf16.msra.mxu0 0
        %463 = vmatprep.subr.bf16.mxu0 0
        %464 = vmatpush1.bf16.msra.mxu0 0
        %465 = vmatprep.subr.bf16.mxu0 0
        %466 = vmatpush1.bf16.msra.mxu0 0
        %467 = vmatprep.subr.bf16.mxu0 0
        %468 = vmatpush1.bf16.msra.mxu0 0
        %469 = vmatprep.subr.bf16.mxu0 0
        %470 = vmatpush1.bf16.msra.mxu0 0
        %471 = vmatprep.subr.bf16.mxu0 0
        %472 = vmatpush1.bf16.msra.mxu0 0
        %473 = vmatprep.mubr.bf16.mxu0 0
        %474 = vmatmul.mubr.bf16.gmra.mrb[0].mxu0 %v361
        %v475 = vpop.f32.mrb[0].mxu0
        %v476 = vadd.f32 %v295, %v475
        %v477 = vpop.f32.mrb[0].mxu0
        %v478 = vpop.f32.mrb[0].mxu0
        %v479 = vadd.f32 %v295, %v478
        %v480 = vpop.f32.mrb[0].mxu0
        %481 = vmatprep.mubr.bf16.mxu0 0
        %482 = vmatmul.mubr.bf16.gmra.mrb[0].mxu0 %v362
        %v483 = vpop.f32.mrb[0].mxu0
        %v484 = vadd.f32 %v295, %v483
        %v485 = vpop.f32.mrb[0].mxu0
        %v486 = vpop.f32.mrb[0].mxu0
        %v487 = vadd.f32 %v295, %v486
        %v488 = vpop.f32.mrb[0].mxu0
        %489 = vmatprep.mubr.bf16.mxu0 0
        %490 = vmatmul.mubr.bf16.gmra.mrb[0].mxu0 %v363
        %v491 = vpop.f32.mrb[0].mxu0
        %v492 = vadd.f32 %v295, %v491
        %v493 = vpop.f32.mrb[0].mxu0
        %v494 = vpop.f32.mrb[0].mxu0
        %v495 = vadd.f32 %v295, %v494
        %v496 = vpop.f32.mrb[0].mxu0
        %497 = vmatprep.mubr.bf16.mxu0 0
        %498 = vmatmul.mubr.bf16.gmra.mrb[0].mxu0 %v364
        %v499 = vpop.f32.mrb[0].mxu0
        %v500 = vadd.f32 %v295, %v499
        %v501 = vpop.f32.mrb[0].mxu0
        %v502 = vpop.f32.mrb[0].mxu0
        %v503 = vadd.f32 %v295, %v502
        %v504 = vpop.f32.mrb[0].mxu0
        %505 = vmatprep.mubr.bf16.mxu0 0
        %506 = vmatmul.mubr.bf16.gmra.mrb[0].mxu0 %v365
        %v507 = vpop.f32.mrb[0].mxu0
        %v508 = vadd.f32 %v295, %v507
        %v509 = vpop.f32.mrb[0].mxu0
        %v510 = vpop.f32.mrb[0].mxu0
        %v511 = vadd.f32 %v295, %v510
        %v512 = vpop.f32.mrb[0].mxu0
        %513 = vmatprep.mubr.bf16.mxu0 0
        %514 = vmatmul.mubr.bf16.gmra.mrb[0].mxu0 %v366
        %v515 = vpop.f32.mrb[0].mxu0
        %v516 = vadd.f32 %v295, %v515
        %v517 = vpop.f32.mrb[0].mxu0
        %v518 = vpop.f32.mrb[0].mxu0
        %v519 = vadd.f32 %v295, %v518
        %v520 = vpop.f32.mrb[0].mxu0
        %521 = vmatprep.mubr.bf16.mxu0 0
        %522 = vmatmul.mubr.bf16.gmra.mrb[0].mxu0 %v367
        %v523 = vpop.f32.mrb[0].mxu0
        %v524 = vadd.f32 %v295, %v523
        %v525 = vpop.f32.mrb[0].mxu0
        %v526 = vpop.f32.mrb[0].mxu0
        %v527 = vadd.f32 %v295, %v526
        %v528 = vpop.f32.mrb[0].mxu0
        %529 = vmatprep.mubr.bf16.mxu0 0
        %530 = vmatmul.mubr.bf16.gmra.mrb[0].mxu0 %v368
        %v531 = vpop.f32.mrb[0].mxu0
        %v532 = vadd.f32 %v295, %v531
        %v533 = vpop.f32.mrb[0].mxu0
        %v534 = vpop.f32.mrb[0].mxu0
        %v535 = vadd.f32 %v295, %v534
        %v536 = vpop.f32.mrb[0].mxu0
        %537 = vmatprep.mubr.bf16.mxu0 0
        %538 = vmatmul.mubr.bf16.gmra.mrb[0].mxu0 %v369
        %v539 = vpop.f32.mrb[0].mxu0
        %v540 = vadd.f32 %v295, %v539
        %v541 = vpop.f32.mrb[0].mxu0
        %v542 = vpop.f32.mrb[0].mxu0
        %v543 = vadd.f32 %v295, %v542
        %v544 = vpop.f32.mrb[0].mxu0
        %545 = vmatprep.mubr.bf16.mxu0 0
        %546 = vmatmul.mubr.bf16.gmra.mrb[0].mxu0 %v370
        %v547 = vpop.f32.mrb[0].mxu0
        %v548 = vadd.f32 %v295, %v547
        %v549 = vpop.f32.mrb[0].mxu0
        %v550 = vpop.f32.mrb[0].mxu0
        %v551 = vadd.f32 %v295, %v550
        %v552 = vpop.f32.mrb[0].mxu0
        %553 = vmatprep.mubr.bf16.mxu0 0
        %554 = vmatmul.mubr.bf16.gmra.mrb[0].mxu0 %v371
        %v555 = vpop.f32.mrb[0].mxu0
        %v556 = vadd.f32 %v295, %v555
        %v557 = vpop.f32.mrb[0].mxu0
        %v558 = vpop.f32.mrb[0].mxu0
        %v559 = vadd.f32 %v295, %v558
        %v560 = vpop.f32.mrb[0].mxu0
        %561 = vmatprep.mubr.bf16.mxu0 0
        %562 = vmatmul.mubr.bf16.gmra.mrb[0].mxu0 %v372
        %v563 = vpop.f32.mrb[0].mxu0
        %v564 = vadd.f32 %v295, %v563
        %v565 = vpop.f32.mrb[0].mxu0
        %v566 = vpop.f32.mrb[0].mxu0
        %v567 = vadd.f32 %v295, %v566
        %v568 = vpop.f32.mrb[0].mxu0
        %569 = vmatprep.mubr.bf16.mxu0 0
        %570 = vmatmul.mubr.bf16.gmra.mrb[0].mxu0 %v373
        %v571 = vpop.f32.mrb[0].mxu0
        %v572 = vadd.f32 %v295, %v571
        %v573 = vpop.f32.mrb[0].mxu0
        %v574 = vpop.f32.mrb[0].mxu0
        %v575 = vadd.f32 %v295, %v574
        %v576 = vpop.f32.mrb[0].mxu0
        %577 = vmatprep.mubr.bf16.mxu0 0
        %578 = vmatmul.mubr.bf16.gmra.mrb[0].mxu0 %v374
        %v579 = vpop.f32.mrb[0].mxu0
        %v580 = vadd.f32 %v295, %v579
        %v581 = vpop.f32.mrb[0].mxu0
        %v582 = vpop.f32.mrb[0].mxu0
        %v583 = vadd.f32 %v295, %v582
        %v584 = vpop.f32.mrb[0].mxu0
        %585 = vmatprep.mubr.bf16.mxu0 0
        %586 = vmatmul.mubr.bf16.gmra.mrb[0].mxu0 %v375
        %v587 = vpop.f32.mrb[0].mxu0
        %v588 = vadd.f32 %v295, %v587
        %v589 = vpop.f32.mrb[0].mxu0
        %v590 = vpop.f32.mrb[0].mxu0
        %v591 = vadd.f32 %v295, %v590
        %v592 = vpop.f32.mrb[0].mxu0
        %593 = vmatprep.mubr.bf16.mxu0 0
        %594 = vmatmul.mubr.bf16.gmra.mrb[0].mxu0 %v376
        %v595 = vpop.f32.mrb[0].mxu0
        %v596 = vadd.f32 %v295, %v595
        %v597 = vpop.f32.mrb[0].mxu0
        %v598 = vpop.f32.mrb[0].mxu0
        %v599 = vadd.f32 %v295, %v598
        %v600 = vpop.f32.mrb[0].mxu0
        %601 = vdwg.mxu0
        %v602 = vsub.f32 0.0, %v476
        %v603 = vsub.f32 0.0, %v479
        %v604 = vsub.f32 0.0, %v484
        %v605 = vsub.f32 0.0, %v487
        %v606 = vsub.f32 0.0, %v492
        %v607 = vsub.f32 0.0, %v495
        %v608 = vsub.f32 0.0, %v500
        %v609 = vsub.f32 0.0, %v503
        %v610 = vsub.f32 0.0, %v508
        %v611 = vsub.f32 0.0, %v511
        %v612 = vsub.f32 0.0, %v516
        %v613 = vsub.f32 0.0, %v519
        %v614 = vsub.f32 0.0, %v524
        %v615 = vsub.f32 0.0, %v527
        %v616 = vsub.f32 0.0, %v532
        %v617 = vsub.f32 0.0, %v535
        %v618 = vsub.f32 0.0, %v540
        %v619 = vsub.f32 0.0, %v543
        %v620 = vsub.f32 0.0, %v548
        %v621 = vsub.f32 0.0, %v551
        %v622 = vsub.f32 0.0, %v556
        %v623 = vsub.f32 0.0, %v559
        %v624 = vsub.f32 0.0, %v564
        %v625 = vsub.f32 0.0, %v567
        %v626 = vsub.f32 0.0, %v572
        %v627 = vsub.f32 0.0, %v575
        %v628 = vsub.f32 0.0, %v580
        %v629 = vsub.f32 0.0, %v583
        %v630 = vsub.f32 0.0, %v588
        %v631 = vsub.f32 0.0, %v591
        %v632 = vsub.f32 0.0, %v596
        %v633 = vsub.f32 0.0, %v599
        %v634 = vmul.f32 %v602, 1.442695
        %v635 = vpow.pop %v634
        %v636 = vmul.f32 %v603, 1.442695
        %v637 = vpow.pop %v636
        %v638 = vmul.f32 %v604, 1.442695
        %v639 = vpow.pop %v638
        %v640 = vmul.f32 %v605, 1.442695
        %v641 = vpow.pop %v640
        %v642 = vmul.f32 %v606, 1.442695
        %v643 = vpow.pop %v642
        %v644 = vmul.f32 %v607, 1.442695
        %v645 = vpow.pop %v644
        %v646 = vmul.f32 %v608, 1.442695
        %v647 = vpow.pop %v646
        %v648 = vmul.f32 %v609, 1.442695
        %v649 = vpow.pop %v648
        %v650 = vmul.f32 %v610, 1.442695
        %v651 = vpow.pop %v650
        %v652 = vmul.f32 %v611, 1.442695
        %v653 = vpow.pop %v652
        %v654 = vmul.f32 %v612, 1.442695
        %v655 = vpow.pop %v654
        %v656 = vmul.f32 %v613, 1.442695
        %v657 = vpow.pop %v656
        %v658 = vmul.f32 %v614, 1.442695
        %v659 = vpow.pop %v658
        %v660 = vmul.f32 %v615, 1.442695
        %v661 = vpow.pop %v660
        %v662 = vmul.f32 %v616, 1.442695
        %v663 = vpow.pop %v662
        %v664 = vmul.f32 %v617, 1.442695
        %v665 = vpow.pop %v664
        %v666 = vmul.f32 %v618, 1.442695
        %v667 = vpow.pop %v666
        %v668 = vmul.f32 %v619, 1.442695
        %v669 = vpow.pop %v668
        %v670 = vmul.f32 %v620, 1.442695
        %v671 = vpow.pop %v670
        %v672 = vmul.f32 %v621, 1.442695
        %v673 = vpow.pop %v672
        %v674 = vmul.f32 %v622, 1.442695
        %v675 = vpow.pop %v674
        %v676 = vmul.f32 %v623, 1.442695
        %v677 = vpow.pop %v676
        %v678 = vmul.f32 %v624, 1.442695
        %v679 = vpow.pop %v678
        %v680 = vmul.f32 %v625, 1.442695
        %v681 = vpow.pop %v680
        %v682 = vmul.f32 %v626, 1.442695
        %v683 = vpow.pop %v682
        %v684 = vmul.f32 %v627, 1.442695
        %v685 = vpow.pop %v684
        %v686 = vmul.f32 %v628, 1.442695
        %v687 = vpow.pop %v686
        %v688 = vmul.f32 %v629, 1.442695
        %v689 = vpow.pop %v688
        %v690 = vmul.f32 %v630, 1.442695
        %v691 = vpow.pop %v690
        %v692 = vmul.f32 %v631, 1.442695
        %v693 = vpow.pop %v692
        %v694 = vmul.f32 %v632, 1.442695
        %v695 = vpow.pop %v694
        %v696 = vmul.f32 %v633, 1.442695
        %v697 = vpow.pop %v696
        %v698 = vadd.f32 %v635, 1.0
        %v699 = vadd.f32 %v637, 1.0
        %v700 = vadd.f32 %v639, 1.0
        %v701 = vadd.f32 %v641, 1.0
        %v702 = vadd.f32 %v643, 1.0
        %v703 = vadd.f32 %v645, 1.0
        %v704 = vadd.f32 %v647, 1.0
        %v705 = vadd.f32 %v649, 1.0
        %v706 = vadd.f32 %v651, 1.0
        %v707 = vadd.f32 %v653, 1.0
        %v708 = vadd.f32 %v655, 1.0
        %v709 = vadd.f32 %v657, 1.0
        %v710 = vadd.f32 %v659, 1.0
        %v711 = vadd.f32 %v661, 1.0
        %v712 = vadd.f32 %v663, 1.0
        %v713 = vadd.f32 %v665, 1.0
        %v714 = vadd.f32 %v667, 1.0
        %v715 = vadd.f32 %v669, 1.0
        %v716 = vadd.f32 %v671, 1.0
        %v717 = vadd.f32 %v673, 1.0
        %v718 = vadd.f32 %v675, 1.0
        %v719 = vadd.f32 %v677, 1.0
        %v720 = vadd.f32 %v679, 1.0
        %v721 = vadd.f32 %v681, 1.0
        %v722 = vadd.f32 %v683, 1.0
        %v723 = vadd.f32 %v685, 1.0
        %v724 = vadd.f32 %v687, 1.0
        %v725 = vadd.f32 %v689, 1.0
        %v726 = vadd.f32 %v691, 1.0
        %v727 = vadd.f32 %v693, 1.0
        %v728 = vadd.f32 %v695, 1.0
        %v729 = vadd.f32 %v697, 1.0
        %v730 = vrcp.pop %v698
        %v731 = vrcp.pop %v699
        %v732 = vrcp.pop %v700
        %v733 = vrcp.pop %v701
        %v734 = vrcp.pop %v702
        %v735 = vrcp.pop %v703
        %v736 = vrcp.pop %v704
        %v737 = vrcp.pop %v705
        %v738 = vrcp.pop %v706
        %v739 = vrcp.pop %v707
        %v740 = vrcp.pop %v708
        %v741 = vrcp.pop %v709
        %v742 = vrcp.pop %v710
        %v743 = vrcp.pop %v711
        %v744 = vrcp.pop %v712
        %v745 = vrcp.pop %v713
        %v746 = vrcp.pop %v714
        %v747 = vrcp.pop %v715
        %v748 = vrcp.pop %v716
        %v749 = vrcp.pop %v717
        %v750 = vrcp.pop %v718
        %v751 = vrcp.pop %v719
        %v752 = vrcp.pop %v720
        %v753 = vrcp.pop %v721
        %v754 = vrcp.pop %v722
        %v755 = vrcp.pop %v723
        %v756 = vrcp.pop %v724
        %v757 = vrcp.pop %v725
        %v758 = vrcp.pop %v726
        %v759 = vrcp.pop %v727
        %v760 = vrcp.pop %v728
        %v761 = vrcp.pop %v729
        %v762 = vmul.f32 %v476, %v730
        %v763 = vmul.f32 %v479, %v731
        %v764 = vmul.f32 %v484, %v732
        %v765 = vmul.f32 %v487, %v733
        %v766 = vmul.f32 %v492, %v734
        %v767 = vmul.f32 %v495, %v735
        %v768 = vmul.f32 %v500, %v736
        %v769 = vmul.f32 %v503, %v737
        %v770 = vmul.f32 %v508, %v738
        %v771 = vmul.f32 %v511, %v739
        %v772 = vmul.f32 %v516, %v740
        %v773 = vmul.f32 %v519, %v741
        %v774 = vmul.f32 %v524, %v742
        %v775 = vmul.f32 %v527, %v743
        %v776 = vmul.f32 %v532, %v744
        %v777 = vmul.f32 %v535, %v745
        %v778 = vmul.f32 %v540, %v746
        %v779 = vmul.f32 %v543, %v747
        %v780 = vmul.f32 %v548, %v748
        %v781 = vmul.f32 %v551, %v749
        %v782 = vmul.f32 %v556, %v750
        %v783 = vmul.f32 %v559, %v751
        %v784 = vmul.f32 %v564, %v752
        %v785 = vmul.f32 %v567, %v753
        %v786 = vmul.f32 %v572, %v754
        %v787 = vmul.f32 %v575, %v755
        %v788 = vmul.f32 %v580, %v756
        %v789 = vmul.f32 %v583, %v757
        %v790 = vmul.f32 %v588, %v758
        %v791 = vmul.f32 %v591, %v759
        %v792 = vmul.f32 %v596, %v760
        %v793 = vmul.f32 %v599, %v761
        %794 = vst [vmem:[%s235] sm:$0xff] %v762
        %795 = vst [vmem:[%s235 + $0x8] sm:$0xff] %v763
        %796 = vst [vmem:[%s235 + $0x10] sm:$0xff] %v764
        %797 = vst [vmem:[%s235 + $0x18] sm:$0xff] %v765
        %798 = vst [vmem:[%s235 + $0x20] sm:$0xff] %v766
        %799 = vst [vmem:[%s235 + $0x28] sm:$0xff] %v767
        %800 = vst [vmem:[%s235 + $0x30] sm:$0xff] %v768
        %801 = vst [vmem:[%s235 + $0x38] sm:$0xff] %v769
        %802 = vst [vmem:[%s235 + $0x40] sm:$0xff] %v770
        %803 = vst [vmem:[%s235 + $0x48] sm:$0xff] %v771
        %804 = vst [vmem:[%s235 + $0x50] sm:$0xff] %v772
        %805 = vst [vmem:[%s235 + $0x58] sm:$0xff] %v773
        %806 = vst [vmem:[%s235 + $0x60] sm:$0xff] %v774
        %807 = vst [vmem:[%s235 + $0x68] sm:$0xff] %v775
        %808 = vst [vmem:[%s235 + $0x70] sm:$0xff] %v776
        %809 = vst [vmem:[%s235 + $0x78] sm:$0xff] %v777
        %810 = vst [vmem:[%s235 + $0x80] sm:$0xff] %v778
        %811 = vst [vmem:[%s235 + $0x88] sm:$0xff] %v779
        %812 = vst [vmem:[%s235 + $0x90] sm:$0xff] %v780
        %813 = vst [vmem:[%s235 + $0x98] sm:$0xff] %v781
        %814 = vst [vmem:[%s235 + $0xa0] sm:$0xff] %v782
        %815 = vst [vmem:[%s235 + $0xa8] sm:$0xff] %v783
        %816 = vst [vmem:[%s235 + $0xb0] sm:$0xff] %v784
        %817 = vst [vmem:[%s235 + $0xb8] sm:$0xff] %v785
        %818 = vst [vmem:[%s235 + $0xc0] sm:$0xff] %v786
        %819 = vst [vmem:[%s235 + $0xc8] sm:$0xff] %v787
        %820 = vst [vmem:[%s235 + $0xd0] sm:$0xff] %v788
        %821 = vst [vmem:[%s235 + $0xd8] sm:$0xff] %v789
        %822 = vst [vmem:[%s235 + $0xe0] sm:$0xff] %v790
        %823 = vst [vmem:[%s235 + $0xe8] sm:$0xff] %v791
        %824 = vst [vmem:[%s235 + $0xf0] sm:$0xff] %v792
        %825 = vst [vmem:[%s235 + $0xf8] sm:$0xff] %v793
        %s826 = sand.u32 %s121, 1
        %s827 = scalar_lea.sflag [#allocation4], %s826
        %s828 = sand.u32 %s121, 1
        %s829 = smul.addr %s828, 256
        %s830 = scalar_lea.vmem [#allocation7], %s829
        // Predicated region
        $region41: #{tpu_custom_call.1} parent=31 // pred_check
          %p831 = pneg %p131
        $region42: #{tpu_custom_call.1} parent=31 // pred_check_branch
          %833 = sbr.rel (%p831) target = $region44
        $region43: #{tpu_custom_call.1} parent=31 // pred_region
          %s834 = smul.u32 32, %s25
          %s836 = ssub.s32 4096, 4096
          %837 = vsyncadd %s827, %s836
          %s838 = sadd.s32 %s26, %s834
          %s839 = smul.addr %s838, 128
          %s840 = scalar_lea.hbm %s3, %s839
          %s841 = sshll.u32 %s830, 4
          %s842 = int_to_ptr.vmem [resolvable:$true] %s841
          %847 = dma.vmem_to_hbm [thread:$0]  %s842, 4096, %s840, %s827, 128, 128, 8
        $region44: #{tpu_custom_call.1} parent=31 // pred_fallthru
          _
      $region32: #{tpu_custom_call.1} parent=5 // pred_fallthru
        _
      %p848 = scmp.le.s32.totalorder 2, %s16
      // Predicated region
      $region45: #{tpu_custom_call.1} parent=5 // pred_check
        %p849 = pneg %p848
      $region46: #{tpu_custom_call.1} parent=5 // pred_check_branch
        %851 = sbr.rel (%p849) target = $region48
      $region47: #{tpu_custom_call.1} parent=5 // pred_region
        %s852 = ssub.s32 %s16, 2
        // Predicated region
        $region49: #{tpu_custom_call.1} parent=47 // pred_check
          %p853 = pneg %p137
        $region50: #{tpu_custom_call.1} parent=47 // pred_check_branch
          %855 = sbr.rel (%p853) target = $region52
        $region51: #{tpu_custom_call.1} parent=47 // pred_region
          %s856 = sand.u32 %s122, 1
          %s857 = scalar_lea.sflag [#allocation4], %s856
          %s858 = sand.u32 %s122, 1
          %s859 = smul.addr %s858, 256
          %s860 = scalar_lea.vmem [#allocation7], %s859
          %861 = dma.done %s857, 4096
        $region52: #{tpu_custom_call.1} parent=47 // pred_fallthru
          _
      $region48: #{tpu_custom_call.1} parent=5 // pred_fallthru
        _
    $region6: #{tpu_custom_call.1} parent=1 // loop_footer
      %s20 = sadd.s32 1, %s16
    $region7: #{tpu_custom_call.1} parent=1 // loop_footer_branch
      %15 = sbr.rel target = $region3
    $region8: #{tpu_custom_call.1} parent=1 // loop_exit
      _
    %862 = vsyncpa [#allocation3], 1
    %s863 = scalar_lea.sflag [#allocation3], 1
    %864 = vsyncpa %s863, 1
    %865 = vsyncpa [#allocation6], 1
    %866 = vsyncpa [#allocation4], 1
    %s867 = scalar_lea.sflag [#allocation4], 1
    %868 = vsyncpa %s867, 1

</llo_original>
